<compile_context>
chip_gen: v7x
topology: tpu7x:2x2x1
jax: 0.10.0
libtpu: 0.0.40
codegen_flags: <defaults>
</compile_context>

<pallas_src>
import functools

import jax
import jax.numpy as jnp
from jax import lax
from jax.experimental import pallas as pl
from jax.experimental.pallas import tpu as pltpu

GAMMA = 2
ALPHA = -1
REDUCTION = "mean"

_LANE = 128
_SUBLANE = 8
_CHUNK_ROWS = 64                 # inner-loop sub-chunk: bounds live vreg ranges
_X_PAD = -1e4                    # pad logit; with t=0 gives exactly zero loss
_TILE_ROW_CANDIDATES = (4096, 2048, 1024, 512, 256, 128, 64, 32, 16, 8)


def _focal_loss_kernel(x_ref, t_ref, out_ref, acc_ref, *, gamma, alpha,
                       tile_rows, chunk_rows):
    i = pl.program_id(1)

    @pl.when(i == 0)
    def _():
        acc_ref[...] = jnp.zeros_like(acc_ref)

    n_chunks = tile_rows // chunk_rows

    def chunk_partial(j, carry):
        r0 = pl.multiple_of(j * chunk_rows, chunk_rows)
        x = x_ref[pl.ds(r0, chunk_rows), :].astype(jnp.float32)
        t = t_ref[pl.ds(r0, chunk_rows), :].astype(jnp.float32)

        # Shared sub-expression: s = log1p(exp(-|x|)).
        s = jnp.log1p(jnp.exp(-jnp.abs(x)))
        xpos = jnp.maximum(x, 0.0)

        # Numerically stable BCE-with-logits (reduction='none'):
        #   max(x, 0) - x*t + log1p(exp(-|x|))
        ce = xpos - x * t + s

        # sigmoid(x) = exp(x - softplus(x)) -> reuses s, no divide.
        # TODO(synk): on v7x, if the bundle shows the EUP slot saturating,
        # switch to p = where(x>=0, r, e*r) with r = pl.reciprocal(1+e, True).
        p = jnp.exp(x - xpos - s)

        # Fused focal weight: q = 1 - p_t = p + t - 2*p*t  (p_t dropped).
        q = p + t - 2.0 * (p * t)
        mod = q * q if float(gamma) == 2.0 else q ** gamma
        loss = ce * mod

        if alpha >= 0:
            alpha_t = alpha * t + (1.0 - alpha) * (1.0 - t)
            loss = alpha_t * loss

        # Regroup whole (8,128) vreg tiles -> plain vreg-by-vreg VPU adds,
        # no XLU until the epilogue.
        return carry + jnp.sum(
            loss.reshape(chunk_rows // _SUBLANE, _SUBLANE, _LANE), axis=0)

    zero = jnp.zeros((_SUBLANE, _LANE), jnp.float32)
    if n_chunks == 1:
        partial = chunk_partial(0, zero)
    else:
        partial = lax.fori_loop(0, n_chunks, chunk_partial, zero,
                                unroll=True if n_chunks <= 8 else 4)

    # Single read-modify-write of the VMEM accumulator per grid step.
    acc_ref[...] += partial

    @pl.when(i == pl.num_programs(1) - 1)
    def _():
        # One cross-lane/sublane reduce per split, done once at the end.
        out_ref[0, 0] = jnp.sum(acc_ref[...])


def _num_tensorcores() -> int:
    """2 TensorCores per chip on v7x (and megacore v4/v5p); 1 on v5e/v6e."""
    try:
        kind = jax.devices()[0].device_kind.lower()
    except Exception:  # pragma: no cover - defensive
        return 1
    return 2 if ("v7" in kind or "v4" in kind or "v5p" in kind) else 1


def focal_loss(inputs, targets, *, gamma=GAMMA, alpha=ALPHA,
               reduction=REDUCTION):
    assert inputs.shape == targets.shape
    if reduction not in ("mean", "sum"):
        # TODO(synk): reduction='none' (per-element output) not implemented.
        raise NotImplementedError("reduction='none' is not supported")

    n = int(inputs.size)
    flat_x = inputs.reshape(-1)
    flat_t = targets.reshape(-1)
    # NOTE: bf16 targets are only lossless for hard {0,1} labels; pass f32
    # targets for soft labels to match the PyTorch reference bit-for-bit.

    rows = pl.cdiv(n, _LANE)

    # Split across TensorCores only where it helps (v7x / megacore chips).
    num_splits = _num_tensorcores()
    if rows < num_splits * _SUBLANE:
        num_splits = 1
    rows_per_split = pl.cdiv(rows, num_splits)

    # Largest tile not exceeding the per-split work; padding (below) removes
    # the old exact-divisibility requirement, so awkward sizes no longer
    # collapse to tiny (8,128) tiles.
    tile_rows = _SUBLANE
    for cand in _TILE_ROW_CANDIDATES:
        if cand <= rows_per_split:
            tile_rows = cand
            break
    blocks_per_split = pl.cdiv(rows_per_split, tile_rows)
    padded_rows = num_splits * blocks_per_split * tile_rows
    padded_n = padded_rows * _LANE

    # Avoid sub-native target tiles: 16-bit blocks need >=16 rows, int8 >=32.
    t_itemsize = jnp.dtype(flat_t.dtype).itemsize
    min_rows = {1: 32, 2: 16}.get(t_itemsize, _SUBLANE)
    if tile_rows < min_rows:
        flat_t = flat_t.astype(jnp.float32)

    if padded_n != n:
        pad = padded_n - n
        # x=-1e4 with t=0 yields exactly zero loss -> no in-kernel mask.
        flat_x = jnp.pad(flat_x, (0, pad), constant_values=_X_PAD)
        flat_t = jnp.pad(flat_t, (0, pad), constant_values=0)

    x2d = flat_x.reshape(padded_rows, _LANE)
    t2d = flat_t.reshape(padded_rows, _LANE)

    chunk_rows = min(_CHUNK_ROWS, tile_rows)

    kernel = functools.partial(
        _focal_loss_kernel, gamma=gamma, alpha=alpha,
        tile_rows=tile_rows, chunk_rows=chunk_rows)

    def in_map(c, i):
        return (c * blocks_per_split + i, 0)

    partials = pl.pallas_call(
        kernel,
        out_shape=jax.ShapeDtypeStruct((num_splits, 1), jnp.float32),
        grid_spec=pltpu.PrefetchScalarGridSpec(
            num_scalar_prefetch=0,
            grid=(num_splits, blocks_per_split),
            in_specs=[
                pl.BlockSpec((tile_rows, _LANE), in_map),
                pl.BlockSpec((tile_rows, _LANE), in_map),
            ],
            out_specs=pl.BlockSpec(
                (1, 1), lambda c, i: (c, 0), memory_space=pltpu.SMEM
            ),
            scratch_shapes=[pltpu.VMEM((_SUBLANE, _LANE), jnp.float32)],
        ),
        compiler_params=pltpu.CompilerParams(
            dimension_semantics=("parallel", "arbitrary"),
            vmem_limit_bytes=32 * 1024 * 1024,
        ),
    )(x2d, t2d)

    total = jnp.sum(partials)
    if reduction == "mean":
        return total / n
    return total


def _reference(inputs, targets, gamma=GAMMA, alpha=ALPHA, reduction=REDUCTION):
    p = jax.nn.sigmoid(inputs)
    ce = jnp.maximum(inputs, 0.0) - inputs * targets + jnp.log1p(
        jnp.exp(-jnp.abs(inputs)))
    p_t = p * targets + (1.0 - p) * (1.0 - targets)
    loss = ce * (1.0 - p_t) ** gamma
    if alpha >= 0:
        alpha_t = alpha * targets + (1.0 - alpha) * (1.0 - targets)
        loss = alpha_t * loss
    if reduction == "mean":
        return loss.mean()
    elif reduction == "sum":
        return loss.sum()
    return loss


if __name__ == "__main__":
    key = jax.random.PRNGKey(0)
    k_x, k_t, k_x2, k_t2 = jax.random.split(key, 4)

    # Case 1: NCHW logits (batch=2, channels=4, spatial=16x16), hard {0,1}
    # labels streamed as bf16 (lossless for hard labels, 25% less HBM).
    x = jax.random.normal(k_x, (2, 4, 16, 16), dtype=jnp.float32)
    t = (jax.random.uniform(k_t, (2, 4, 16, 16)) > 0.5).astype(jnp.bfloat16)
    out = jax.block_until_ready(focal_loss(x, t))
    ref = _reference(x, t.astype(jnp.float32))
    assert jnp.allclose(out, ref, rtol=1e-5, atol=1e-6), (out, ref)

    # Case 2: ragged size (not a multiple of 8*128) with soft f32 targets —
    # exercises the padded tail path and the fused focal-weight math.
    x2 = jax.random.normal(k_x2, (3, 5, 7, 9), dtype=jnp.float32)
    t2 = jax.random.uniform(k_t2, (3, 5, 7, 9), dtype=jnp.float32)
    out2 = jax.block_until_ready(focal_loss(x2, t2))
    ref2 = _reference(x2, t2)
    assert jnp.allclose(out2, ref2, rtol=1e-5, atol=1e-6), (out2, ref2)

    print("KERNEL_OK")
</pallas_src>

<mosaic_0001>
module attributes {stable_mosaic.version = 11 : i64} {
  func.func @_focal_loss_kernel(%arg0: i32, %arg1: i32, %arg2: memref<16x128xf32, #tpu.memory_space<vmem>>, %arg3: memref<16x128xbf16, #tpu.memory_space<vmem>>, %arg4: memref<1x1xf32, #tpu.memory_space<smem>>, %arg5: memref<8x128xf32, #tpu.memory_space<vmem>>) attributes {dimension_semantics = [#tpu.dimension_semantics<parallel>, #tpu.dimension_semantics<arbitrary>], iteration_bounds = array<i64: 1, 1>, scalar_prefetch = 0 : i64, scratch_operands = 1 : i64, tpu.core_type = #tpu.core_type<tc>, window_params = [{transform_indices = @transform_0, window_bounds = array<i64: 16, 128>}, {transform_indices = @transform_1, window_bounds = array<i64: 16, 128>}, {transform_indices = @transform_2, window_bounds = array<i64: 1, 1>}]} {
    %c0_i32 = arith.constant 0 : i32
    %0 = arith.cmpi eq, %arg1, %c0_i32 : i32
    %1 = arith.extui %0 : i1 to i32
    %c0_i32_0 = arith.constant 0 : i32
    %2 = arith.cmpi ne, %1, %c0_i32_0 : i32
    scf.if %2 {
      %cst_13 = arith.constant 0.000000e+00 : f32
      %39 = vector.broadcast %cst_13 : f32 to vector<8x128xf32>
      %c0_14 = arith.constant 0 : index
      %c0_15 = arith.constant 0 : index
      %40 = vector.load %arg5[%c0_14, %c0_15] : memref<8x128xf32, #tpu.memory_space<vmem>>, vector<8x128xf32>
      tpu.vector_store %arg5[%c0_14, %c0_15], %39 {strides = array<i32>} : memref<8x128xf32, #tpu.memory_space<vmem>>, vector<8x128xf32>,
    } else {
    }
    %cst = arith.constant 0.000000e+00 : f32
    %3 = vector.broadcast %cst : f32 to vector<8x128xf32>
    %c0_i32_1 = arith.constant 0 : i32
    %4 = tpu.assume_multiple %c0_i32_1, 16 : i32
    %5 = arith.index_cast %4 : i32 to index
    %c0 = arith.constant 0 : index
    %6 = vector.load %arg2[%5, %c0] : memref<16x128xf32, #tpu.memory_space<vmem>>, vector<16x128xf32>
    %7 = arith.index_cast %4 : i32 to index
    %c0_2 = arith.constant 0 : index
    %8 = vector.load %arg3[%7, %c0_2] : memref<16x128xbf16, #tpu.memory_space<vmem>>, vector<16x128xbf16>
    %9 = arith.extf %8 : vector<16x128xbf16> to vector<16x128xf32>
    %10 = math.absf %6 : vector<16x128xf32>
    %cst_3 = arith.constant 0.000000e+00 : f32
    %11 = vector.broadcast %cst_3 : f32 to vector<16x128xf32>
    %12 = arith.subf %11, %10 : vector<16x128xf32>
    %13 = math.exp %12 : vector<16x128xf32>
    %14 = math.log1p %13 : vector<16x128xf32>
    %cst_4 = arith.constant 0.000000e+00 : f32
    %15 = vector.broadcast %cst_4 : f32 to vector<16x128xf32>
    %16 = arith.maximumf %6, %15 : vector<16x128xf32>
    %17 = arith.mulf %6, %9 : vector<16x128xf32>
    %18 = arith.subf %16, %17 : vector<16x128xf32>
    %19 = arith.addf %18, %14 : vector<16x128xf32>
    %20 = arith.subf %6, %16 : vector<16x128xf32>
    %21 = arith.subf %20, %14 : vector<16x128xf32>
    %22 = math.exp %21 : vector<16x128xf32>
    %23 = arith.addf %22, %9 : vector<16x128xf32>
    %24 = arith.mulf %22, %9 : vector<16x128xf32>
    %cst_5 = arith.constant 2.000000e+00 : f32
    %25 = vector.broadcast %cst_5 : f32 to vector<16x128xf32>
    %26 = arith.mulf %25, %24 : vector<16x128xf32>
    %27 = arith.subf %23, %26 : vector<16x128xf32>
    %28 = arith.mulf %27, %27 : vector<16x128xf32>
    %29 = arith.mulf %19, %28 : vector<16x128xf32>
    %30 = vector.shape_cast %29 : vector<16x128xf32> to vector<2x8x128xf32>
    %cst_6 = arith.constant dense<0.000000e+00> : vector<8x128xf32>
    %31 = vector.multi_reduction <add>, %30, %cst_6 [0] : vector<2x8x128xf32> to vector<8x128xf32>
    %32 = arith.addf %3, %31 : vector<8x128xf32>
    %c0_7 = arith.constant 0 : index
    %c0_8 = arith.constant 0 : index
    %33 = vector.load %arg5[%c0_7, %c0_8] : memref<8x128xf32, #tpu.memory_space<vmem>>, vector<8x128xf32>
    %34 = arith.addf %33, %32 : vector<8x128xf32>
    %c0_9 = arith.constant 0 : index
    %c0_10 = arith.constant 0 : index
    %35 = vector.load %arg5[%c0_9, %c0_10] : memref<8x128xf32, #tpu.memory_space<vmem>>, vector<8x128xf32>
    tpu.vector_store %arg5[%c0_9, %c0_10], %34 {strides = array<i32>} : memref<8x128xf32, #tpu.memory_space<vmem>>, vector<8x128xf32>,
    %c0_i32_11 = arith.constant 0 : i32
    %36 = arith.cmpi eq, %arg1, %c0_i32_11 : i32
    %37 = arith.extui %36 : i1 to i32
    %c0_i32_12 = arith.constant 0 : i32
    %38 = arith.cmpi ne, %37, %c0_i32_12 : i32
    scf.if %38 {
      %c0_13 = arith.constant 0 : index
      %c0_14 = arith.constant 0 : index
      %39 = vector.load %arg5[%c0_13, %c0_14] : memref<8x128xf32, #tpu.memory_space<vmem>>, vector<8x128xf32>
      %40 = vector.shape_cast %39 : vector<8x128xf32> to vector<1x8x128xf32>
      %cst_15 = arith.constant dense<0.000000e+00> : vector<1xf32>
      %41 = vector.multi_reduction <add>, %40, %cst_15 [1, 2] : vector<1x8x128xf32> to vector<1xf32>
      %42 = vector.shape_cast %41 : vector<1xf32> to vector<1x1x1xf32>
      %43 = vector.extract %42[0, 0, 0] : f32 from vector<1x1x1xf32>
      %c0_16 = arith.constant 0 : index
      %c0_17 = arith.constant 0 : index
      %44 = memref.load %arg4[%c0_16, %c0_17] : memref<1x1xf32, #tpu.memory_space<smem>>
      memref.store %43, %arg4[%c0_16, %c0_17] : memref<1x1xf32, #tpu.memory_space<smem>>
    } else {
    }
    return
  }
  func.func @transform_0(%arg0: i32, %arg1: i32) -> (i32, i32) {
    %c1_i32 = arith.constant 1 : i32
    %0 = arith.muli %arg0, %c1_i32 : i32
    %1 = arith.addi %0, %arg1 : i32
    %c0_i32 = arith.constant 0 : i32
    %c0_i32_0 = arith.constant 0 : i32
    return %1, %c0_i32 : i32, i32
  }
  func.func @transform_1(%arg0: i32, %arg1: i32) -> (i32, i32) {
    %c1_i32 = arith.constant 1 : i32
    %0 = arith.muli %arg0, %c1_i32 : i32
    %1 = arith.addi %0, %arg1 : i32
    %c0_i32 = arith.constant 0 : i32
    %c0_i32_0 = arith.constant 0 : i32
    return %1, %c0_i32 : i32, i32
  }
  func.func @transform_2(%arg0: i32, %arg1: i32) -> (i32, i32) {
    %c0_i32 = arith.constant 0 : i32
    %c0_i32_0 = arith.constant 0 : i32
    return %arg0, %c0_i32 : i32, i32
  }
}

</mosaic_0001>

<llo_original>
// kernel: tpu_custom_call.1
$region0: #{tpu_custom_call.1}
  #allocation0 [shape = 'u32[]', space=smem, size = 0x4, offset = 0x4, fixed_abs, tag = 'smem constant byte address 0x4 - core index']
  #allocation1 [shape = 'u32[144,128]{1,0:T(1,128)}', space=vmem, size = 0x12000, scoped, tag = 'internal scratch']
  #allocation2 [shape = 'f32[8,128]{1,0:T(8,128)}', space=vmem, size = 0x1000, scoped, tag = 'scratch operand']
  %s0 = inlined_call_operand.hbm [shape: f32[16,128], index: 0, kind: input, shape index: {}]
  %s1 = inlined_call_operand.hbm [shape: bf16[16,128], index: 1, kind: input, shape index: {}]
  %s2 = inlined_call_operand.hbm [shape: f32[1,1], index: 2, kind: output, shape index: {}]
  %s3 = sld [smem:[#allocation0]]
  $region34: #{tpu_custom_call.1} parent=0
    _
  %s5 = ssub.s32 1, %s3
  %s6 = scalar_select 0, %s5, %s3
  $region1: #{tpu_custom_call.1} parent=0
    #allocation3 [shape = 'u8[8192]{0}', space=vmem, size = 0x2000, scoped, tag = 'input window, operand 0, single buffered']
    #allocation4 [shape = 's32[1]{0}', space=sflag, size = 0x4, scoped, tag = 'scoped memory for tpu_custom_call.1']
    #allocation5 [shape = 's32[1]{0}', space=sflag, size = 0x4, scoped, tag = 'scoped memory for tpu_custom_call.1']
    #allocation6 [shape = 'u8[4096]{0}', space=vmem, size = 0x1000, scoped, tag = 'input window, operand 1, single buffered']
    #allocation7 [shape = 's32[1]{0}', space=sflag, size = 0x4, scoped, tag = 'scoped memory for tpu_custom_call.1']
    #allocation8 [shape = 'u8[512]{0}', space=smem, size = 0x200, scoped, tag = 'output window, operand 0, single buffered']
    %7 = vsyncpa [#allocation4], 0
    %8 = vsyncpa [#allocation7], 0
    %9 = vsyncpa [#allocation5], 0
    // Predicated region
    $region2: #{tpu_custom_call.1} parent=1 // pred_check
      _
    $region3: #{tpu_custom_call.1} parent=1 // pred_check_branch
      %11 = sbr.rel (0) target = $region5
    $region4: #{tpu_custom_call.1} parent=1 // pred_region
      %s12 = sadd.s32 0, 0
      %s13 = smul.u32 2, %s12
      %s15 = ssub.s32 256, 256
      %16 = vsyncadd [#allocation4], %s15
      %s17 = smul.addr %s13, 128
      %s18 = scalar_lea.hbm %s0, %s17
      %s19 = sshll.u32 [#allocation3], 4
      %s20 = int_to_ptr.vmem [resolvable:$true] %s19
      %25 = dma.hbm_to_vmem [thread:$0]  %s18, 256, %s20, [#allocation4], 128, 128, 8
    $region5: #{tpu_custom_call.1} parent=1 // pred_fallthru
      _
    // Predicated region
    $region6: #{tpu_custom_call.1} parent=1 // pred_check
      _
    $region7: #{tpu_custom_call.1} parent=1 // pred_check_branch
      %27 = sbr.rel (0) target = $region9
    $region8: #{tpu_custom_call.1} parent=1 // pred_region
      %s28 = sadd.s32 0, 0
      %s29 = smul.u32 2, %s28
      %s31 = ssub.s32 128, 128
      %32 = vsyncadd [#allocation7], %s31
      %s33 = smul.addr %s29, 64
      %s34 = scalar_lea.hbm %s1, %s33
      %s35 = sshll.u32 [#allocation6], 4
      %s36 = int_to_ptr.vmem [resolvable:$true] %s35
      %41 = dma.hbm_to_vmem [thread:$0]  %s34, 128, %s36, [#allocation7], 64, 64, 4
    $region9: #{tpu_custom_call.1} parent=1 // pred_fallthru
      _
    // Predicated region
    $region10: #{tpu_custom_call.1} parent=1 // pred_check
      _
    $region11: #{tpu_custom_call.1} parent=1 // pred_check_branch
      %43 = sbr.rel (0) target = $region13
    $region12: #{tpu_custom_call.1} parent=1 // pred_region
      %44 = dma.done [#allocation4], 256
    $region13: #{tpu_custom_call.1} parent=1 // pred_fallthru
      _
    // Predicated region
    $region14: #{tpu_custom_call.1} parent=1 // pred_check
      _
    $region15: #{tpu_custom_call.1} parent=1 // pred_check_branch
      %46 = sbr.rel (0) target = $region17
    $region16: #{tpu_custom_call.1} parent=1 // pred_region
      %47 = dma.done [#allocation7], 128
    $region17: #{tpu_custom_call.1} parent=1 // pred_fallthru
      _
    %s48 = sadd.s32 0, 0
    %s49 = smul.u32 2, %s48
    %s50 = sadd.s32 0, 0
    %s51 = smul.u32 2, %s50
    %p52 = scmp.eq.s32.totalorder 0, 0
    // Predicated region
    $region18: #{tpu_custom_call.1} parent=1 // pred_check
      %p53 = pneg %p52
    $region19: #{tpu_custom_call.1} parent=1 // pred_check_branch
      %55 = sbr.rel (%p53) target = $region21
    $region20: #{tpu_custom_call.1} parent=1 // pred_region
      %56 = vst [vmem:[#allocation2] sm:$0xff] 0.0
    $region21: #{tpu_custom_call.1} parent=1 // pred_fallthru
      _
    %v57 = vld [vmem:[#allocation3] sm:$0xff]
    %v58 = vld [vmem:[#allocation3 + $0x8] sm:$0xff]
    %v59 = vld [vmem:[#allocation6] sm:$0xf]
    %v60 = vld [vmem:[#allocation6 + $0x4] sm:$0xf]
    %v61 = vunpack.c.l.bf16 %v59
    %v62 = vunpack.c.l.bf16 %v60
    %v63 = vand.u32 2147483647, %v57
    %v64 = vand.u32 2147483647, %v58
    %v65 = vsub.f32 0.0, %v63
    %v66 = vsub.f32 0.0, %v64
    %v67 = vmul.f32 %v65, 1.442695
    %v68 = vpow.pop %v67
    %v69 = vmul.f32 %v66, 1.442695
    %v70 = vpow.pop %v69
    %v71 = vadd.f32 %v68, 1.0
    %v72 = vlog2.pop %v71
    %v73 = vmul.f32 %v72, 0.6931472
    %v74 = vmul.f32 -0.5, %v68
    %v75 = vadd.f32 %v74, 1.0
    %v76 = vmul.f32 %v75, %v68
    %v77 = vand.u32 2147483647, %v68
    %vm78 = vcmp.lt.f32.partialorder %v77, 0.0004427343
    %v79 = vsel %vm78, %v76, %v73
    %v80 = vadd.f32 %v70, 1.0
    %v81 = vlog2.pop %v80
    %v82 = vmul.f32 %v81, 0.6931472
    %v83 = vmul.f32 -0.5, %v70
    %v84 = vadd.f32 %v83, 1.0
    %v85 = vmul.f32 %v84, %v70
    %v86 = vand.u32 2147483647, %v70
    %vm87 = vcmp.lt.f32.partialorder %v86, 0.0004427343
    %v88 = vsel %vm87, %v85, %v82
    %v89 = vmax.f32 %v57, 0.0
    %v90 = vmax.f32 %v58, 0.0
    %v91 = vmul.f32 %v57, %v61
    %v92 = vmul.f32 %v58, %v62
    %v93 = vsub.f32 %v89, %v91
    %v94 = vsub.f32 %v90, %v92
    %v95 = vadd.f32 %v93, %v79
    %v96 = vadd.f32 %v94, %v88
    %v97 = vsub.f32 %v57, %v89
    %v98 = vsub.f32 %v58, %v90
    %v99 = vsub.f32 %v97, %v79
    %v100 = vsub.f32 %v98, %v88
    %v101 = vmul.f32 %v99, 1.442695
    %v102 = vpow.pop %v101
    %v103 = vmul.f32 %v100, 1.442695
    %v104 = vpow.pop %v103
    %v105 = vadd.f32 %v102, %v61
    %v106 = vadd.f32 %v104, %v62
    %v107 = vmul.f32 %v102, %v61
    %v108 = vmul.f32 %v104, %v62
    %v109 = vmul.f32 %v107, 2.0
    %v110 = vmul.f32 %v108, 2.0
    %v111 = vsub.f32 %v105, %v109
    %v112 = vsub.f32 %v106, %v110
    %v113 = vmul.f32 %v111, %v111
    %v114 = vmul.f32 %v112, %v112
    %v115 = vmul.f32 %v95, %v113
    %v116 = vmul.f32 %v96, %v114
    %v117 = vadd.f32 %v115, %v116
    %v118 = vadd.f32 %v117, 0.0
    %v119 = vld [vmem:[#allocation2] sm:$0xff]
    %v120 = vadd.f32 %v119, %v118
    %121 = vst [vmem:[#allocation2] sm:$0xff] %v120
    // Predicated region
    $region22: #{tpu_custom_call.1} parent=1 // pred_check
      %p122 = pneg %p52
    $region23: #{tpu_custom_call.1} parent=1 // pred_check_branch
      %124 = sbr.rel (%p122) target = $region25
    $region24: #{tpu_custom_call.1} parent=1 // pred_region
      %v125 = vld [vmem:[#allocation2] sm:$0xff]
      %126 = vadd.xlane.f32.xlu0 %v125
      %v127 = vpop.xlane.xlu0 %126
      %v128 = vrot.slane %v127, 4
      %v129 = vadd.f32 %v127, %v128
      %v130 = vrot.slane %v129, 2
      %v131 = vadd.f32 %v129, %v130
      %v132 = vrot.slane %v131, 1
      %v133 = vadd.f32 %v131, %v132
      %s134 = vtos %v133
      %s135 = scalar_lea.smem [#allocation8], 0
      %136 = sst [smem:[%s135]] %s134
    $region25: #{tpu_custom_call.1} parent=1 // pred_fallthru
      _
    // Predicated region
    $region26: #{tpu_custom_call.1} parent=1 // pred_check
      _
    $region27: #{tpu_custom_call.1} parent=1 // pred_check_branch
      %138 = sbr.rel (0) target = $region29
    $region28: #{tpu_custom_call.1} parent=1 // pred_region
      %s140 = ssub.s32 16, 16
      %141 = vsyncadd [#allocation5], %s140
      %144 = dma.smem_to_hbm [#allocation8], 16, %s2, [#allocation5]
    $region29: #{tpu_custom_call.1} parent=1 // pred_fallthru
      _
    // Predicated region
    $region30: #{tpu_custom_call.1} parent=1 // pred_check
      _
    $region31: #{tpu_custom_call.1} parent=1 // pred_check_branch
      %146 = sbr.rel (0) target = $region33
    $region32: #{tpu_custom_call.1} parent=1 // pred_region
      %147 = dma.done [#allocation5], 16
    $region33: #{tpu_custom_call.1} parent=1 // pred_fallthru
      _
    %148 = sfence
    %149 = vsyncpa [#allocation4], 1
    %150 = vsyncpa [#allocation7], 1
    %151 = vsyncpa [#allocation5], 1

</llo_original>
